<compile_context>
chip_gen: v7x
topology: tpu7x:2x2x1
jax: 0.10.0
libtpu: 0.0.40
codegen_flags: <defaults>
</compile_context>

<pallas_src>
import functools

import jax
import jax.numpy as jnp
from jax.experimental import pallas as pl
from jax.experimental.pallas import tpu as pltpu


def _round_up(x, m):
    return (x + m - 1) // m * m


def _split_bf16(x):
    """Split f32 -> (hi, lo) bf16 with hi + lo ~= x to ~16-17 mantissa bits."""
    hi = x.astype(jnp.bfloat16)
    lo = (x - hi.astype(jnp.float32)).astype(jnp.bfloat16)
    return hi, lo


def _pick_tiles(n, tm=None, tk=None, target=512):
    """Tile sizes: big enough to amortize step overhead / fill the MXU, but
    keep >= 2 row blocks when possible (v7x megacore) and never pad the N^2
    adjacency beyond one extra tile per axis."""
    n128 = _round_up(n, 128)
    if tk is None:
        tk = min(target, n128)              # >=256 fills v6e/v7x MXU depth
    if tm is None:
        half = max(128, (n128 // 2) // 128 * 128)
        tm = min(target, half)              # keeps grid[0] >= 2 when N allows
    return tm, tk


def _project_kernel(feat_ref, w_hi_ref, w_lo_ref, y_hi_ref, y_lo_ref):
    """y = feat_ext @ W_ext at ~f32 accuracy (3 bf16 MXU passes); emit hi/lo
    bf16 parts so the aggregation kernel never re-splits in its hot loop."""
    f_hi, f_lo = _split_bf16(feat_ref[...])
    w_hi = w_hi_ref[...]
    y = jnp.dot(f_hi, w_hi, preferred_element_type=jnp.float32)
    y += jnp.dot(f_lo, w_hi, preferred_element_type=jnp.float32)
    y += jnp.dot(f_hi, w_lo_ref[...], preferred_element_type=jnp.float32)
    y_hi = y.astype(jnp.bfloat16)
    y_hi_ref[...] = y_hi
    y_lo_ref[...] = (y - y_hi.astype(jnp.float32)).astype(jnp.bfloat16)


def _aggregate_kernel(adj_ref, y_hi_ref, y_lo_ref, b_ref, out_ref, *, tk, f_out):
    """out = leaky_relu(((A+I) @ y) / (deg+1) + bias), reduction over k tiles.

    out_ref's block index is constant across k, so it stays VMEM-resident and
    doubles as the f32 accumulator.  y_hi/y_lo are full-extent (resident);
    the adjacency tile streams as int8 and is cast to bf16 on the VPU.
    Column `f_out` of y is all-ones, so the same dots accumulate deg+1 exactly.
    """
    k = pl.program_id(1)

    @pl.when(k == 0)
    def _init():
        out_ref[...] = jnp.zeros_like(out_ref)

    adj = adj_ref[...].astype(jnp.float32).astype(jnp.bfloat16)  # 0/1/2 exact
    start = pl.multiple_of(k * tk, tk)
    y_hi = y_hi_ref[pl.ds(start, tk), :]
    y_lo = y_lo_ref[pl.ds(start, tk), :]
    out_ref[...] += (jnp.dot(adj, y_hi, preferred_element_type=jnp.float32)
                     + jnp.dot(adj, y_lo, preferred_element_type=jnp.float32))

    @pl.when(k == pl.num_programs(1) - 1)
    def _finalize():
        acc = out_ref[...]                                # [:, :f_out] = (A+I)@y
        deg_p1 = jnp.maximum(acc[:, f_out:f_out + 1], 1.0)  # exact; pad-safe
        rst = acc / deg_p1 + b_ref[...]
        out_ref[...] = jnp.where(rst >= 0.0, rst, 0.01 * rst)   # leaky_relu


def graph_sage_forward(adj, feat, w_neigh, bias, *, tm=None, tk=None):
    """SAGEConv('gcn', feat_drop=0) + leaky_relu.

    adj:     (N, N) 0/1 adjacency with adj[i, j] = 1 iff edge j -> i.
    feat:    (N, Fin) f32 node features.
    w_neigh: (Fin, Fout) f32.  bias: (Fout,) or (1, Fout) f32.
    """
    n, f_in = feat.shape
    f_out = w_neigh.shape[1]
    bias = bias.reshape(1, f_out)

    tm, tk = _pick_tiles(n, tm, tk)

    # Lane-dense padded widths; the "+1" slot holds the ones/degree column.
    f_in_p = _round_up(f_in + 1, 128)
    f_out_p = _round_up(f_out + 1, 128)
    n_rows_p = _round_up(n, tm)          # output rows   (padded independently)
    n_cols_p = _round_up(n, tk)          # neighbor cols (padded independently)

    # ---- wrapper-side layout plumbing (cheap vs. the N^2 adjacency) --------
    # A + I (self-loop folded in); values {0,1,2} are exact in int8/bf16.
    n_diag = min(n_rows_p, n_cols_p)
    adj_f = jnp.zeros((n_rows_p, n_cols_p), jnp.float32).at[:n, :n].set(
        adj.astype(jnp.float32))
    adj_f = adj_f.at[jnp.arange(n_diag), jnp.arange(n_diag)].add(1.0)
    adj_p = adj_f.astype(jnp.int8)                       # half of bf16 bytes

    feat_e = (jnp.zeros((n_cols_p, f_in_p), jnp.float32)
              .at[:, f_in].set(1.0)                      # ones column (all rows)
              .at[:n, :f_in].set(feat.astype(jnp.float32)))
    w_e = (jnp.zeros((f_in_p, f_out_p), jnp.float32)
           .at[:f_in, :f_out].set(w_neigh.astype(jnp.float32))
           .at[f_in, f_out].set(1.0))                    # routes the ones column
    w_hi = w_e.astype(jnp.bfloat16)
    w_lo = (w_e - w_hi.astype(jnp.float32)).astype(jnp.bfloat16)
    bias_e = jnp.zeros((1, f_out_p), jnp.float32).at[:, :f_out].set(bias)

    # ---- kernel 1: y(hi,lo) = split(feat_ext @ W_ext) -----------------------
    tproj = tk                                            # divides n_cols_p
    y_hi, y_lo = pl.pallas_call(
        _project_kernel,
        out_shape=(jax.ShapeDtypeStruct((n_cols_p, f_out_p), jnp.bfloat16),
                   jax.ShapeDtypeStruct((n_cols_p, f_out_p), jnp.bfloat16)),
        grid_spec=pltpu.PrefetchScalarGridSpec(
            num_scalar_prefetch=0,
            grid=(n_cols_p // tproj,),
            in_specs=[
                pl.BlockSpec((tproj, f_in_p), lambda i: (i, 0)),
                pl.BlockSpec((f_in_p, f_out_p), lambda i: (0, 0)),
                pl.BlockSpec((f_in_p, f_out_p), lambda i: (0, 0)),
            ],
            out_specs=[pl.BlockSpec((tproj, f_out_p), lambda i: (i, 0)),
                       pl.BlockSpec((tproj, f_out_p), lambda i: (i, 0))]),
        compiler_params=pltpu.CompilerParams(
            dimension_semantics=("parallel",)),
    )(feat_e, w_hi, w_lo)

    # ---- kernel 2: out = leaky_relu(((A+I) @ y) / (deg+1) + bias) ----------
    grid = (n_rows_p // tm, n_cols_p // tk)
    y_res_bytes = 2 * n_cols_p * f_out_p * 2             # y_hi + y_lo (bf16)
    vmem_bytes = (2 * tm * tk                             # adj int8 tile x2 buf
                  + 2 * y_res_bytes                       # resident y (x2 cons.)
                  + 2 * tm * f_out_p * 4                  # output/accumulator
                  + 2 * f_out_p * 4)                      # bias
    vmem_limit = int(min(max(vmem_bytes + (8 << 20), 32 << 20), 48 << 20))
    flops = 2 * 2 * n_rows_p * n_cols_p * f_out_p         # two bf16 passes
    bytes_accessed = (n_rows_p * n_cols_p                 # adj (int8)
                      + y_res_bytes                       # y read once
                      + n_rows_p * f_out_p * 4            # out
                      + f_out_p * 4)                      # bias

    out_p = pl.pallas_call(
        functools.partial(_aggregate_kernel, tk=tk, f_out=f_out),
        out_shape=jax.ShapeDtypeStruct((n_rows_p, f_out_p), jnp.float32),
        grid_spec=pltpu.PrefetchScalarGridSpec(
            num_scalar_prefetch=0,
            grid=grid,
            in_specs=[
                pl.BlockSpec((tm, tk), lambda i, k: (i, k)),            # A+I tile
                pl.BlockSpec((n_cols_p, f_out_p), lambda i, k: (0, 0)),  # y_hi
                pl.BlockSpec((n_cols_p, f_out_p), lambda i, k: (0, 0)),  # y_lo
                pl.BlockSpec((1, f_out_p), lambda i, k: (0, 0)),         # bias
            ],
            out_specs=pl.BlockSpec((tm, f_out_p), lambda i, k: (i, 0))),
        compiler_params=pltpu.CompilerParams(
            dimension_semantics=("parallel", "arbitrary"),
            vmem_limit_bytes=vmem_limit),
        cost_estimate=pl.CostEstimate(
            flops=flops, transcendentals=0, bytes_accessed=bytes_accessed),
    )(adj_p, y_hi, y_lo, bias_e)

    return out_p[:n, :f_out]


def reference_forward(adj, feat, w_neigh, bias):
    hp = jax.lax.Precision.HIGHEST
    neigh = jnp.dot(adj, feat, precision=hp)
    deg = jnp.sum(adj, axis=-1, keepdims=True)
    h_neigh = (neigh + feat) / (deg + 1.0)
    rst = jnp.dot(h_neigh, w_neigh, precision=hp) + bias.reshape(1, -1)
    return jnp.where(rst >= 0.0, rst, 0.01 * rst)


if __name__ == "__main__":
    N = 256            # number of graph nodes
    INPUT_SIZE = 16    # in_feats
    HIDDEN_SIZE = 64   # stored by the module but unused in its forward pass
    OUTPUT_SIZE = 32   # out_feats

    key = jax.random.PRNGKey(0)
    k_feat, k_adj, k_w = jax.random.split(key, 3)

    feat = jax.random.normal(k_feat, (N, INPUT_SIZE), dtype=jnp.float32)

    # Deterministic sparse-ish graph: ~10% directed edges, no self loops.
    adj = (jax.random.uniform(k_adj, (N, N)) < 0.1).astype(jnp.float32)
    adj = adj * (1.0 - jnp.eye(N, dtype=jnp.float32))

    # fc_neigh weight (Xavier-uniform style) + separate zero bias, matching
    # SAGEConv('gcn') which has fc_neigh(bias=False) and its own bias param.
    limit = (6.0 / (INPUT_SIZE + OUTPUT_SIZE)) ** 0.5
    w_neigh = jax.random.uniform(k_w, (INPUT_SIZE, OUTPUT_SIZE),
                                 minval=-limit, maxval=limit,
                                 dtype=jnp.float32)
    bias = jnp.zeros((OUTPUT_SIZE,), dtype=jnp.float32)

    out = graph_sage_forward(adj, feat, w_neigh, bias)
    out = jax.block_until_ready(out)

    ref = reference_forward(adj, feat, w_neigh, bias)
    assert out.shape == (N, OUTPUT_SIZE)
    err = float(jnp.max(jnp.abs(out - ref)))
    assert jnp.allclose(out, ref, atol=5e-4, rtol=5e-4), err

    print("KERNEL_OK")
</pallas_src>

<mosaic_0001>
module attributes {stable_mosaic.version = 11 : i64} {
  func.func @_project_kernel(%arg0: i32, %arg1: memref<256x128xf32, #tpu.memory_space<vmem>>, %arg2: memref<128x128xbf16, #tpu.memory_space<vmem>>, %arg3: memref<128x128xbf16, #tpu.memory_space<vmem>>, %arg4: memref<256x128xbf16, #tpu.memory_space<vmem>>, %arg5: memref<256x128xbf16, #tpu.memory_space<vmem>>) attributes {dimension_semantics = [#tpu.dimension_semantics<parallel>], iteration_bounds = array<i64: 1>, scalar_prefetch = 0 : i64, scratch_operands = 0 : i64, tpu.core_type = #tpu.core_type<tc>, window_params = [{transform_indices = @transform_0, window_bounds = array<i64: 256, 128>}, {pipeline_mode = #tpu.pipeline_mode<synchronous>, transform_indices = @transform_1, window_bounds = array<i64: 128, 128>}, {pipeline_mode = #tpu.pipeline_mode<synchronous>, transform_indices = @transform_2, window_bounds = array<i64: 128, 128>}, {transform_indices = @transform_3, window_bounds = array<i64: 256, 128>}, {transform_indices = @transform_4, window_bounds = array<i64: 256, 128>}]} {
    %c0 = arith.constant 0 : index
    %c0_0 = arith.constant 0 : index
    %0 = vector.load %arg1[%c0, %c0_0] : memref<256x128xf32, #tpu.memory_space<vmem>>, vector<256x128xf32>
    %1 = arith.truncf %0 : vector<256x128xf32> to vector<256x128xbf16>
    %2 = arith.extf %1 : vector<256x128xbf16> to vector<256x128xf32>
    %3 = arith.subf %0, %2 : vector<256x128xf32>
    %4 = arith.truncf %3 : vector<256x128xf32> to vector<256x128xbf16>
    %c0_1 = arith.constant 0 : index
    %c0_2 = arith.constant 0 : index
    %5 = vector.load %arg2[%c0_1, %c0_2] : memref<128x128xbf16, #tpu.memory_space<vmem>>, vector<128x128xbf16>
    %cst = arith.constant dense<0.000000e+00> : vector<256x128xf32>
    %6 = tpu.matmul %1, %5, %cst {dimension_numbers = #tpu.dot_dimension_numbers<[1], [0], [0], [1], [0, 0, 1, 1], [], []>} : vector<256x128xbf16>, vector<128x128xbf16>, vector<256x128xf32> -> vector<256x128xf32>
    %cst_3 = arith.constant dense<0.000000e+00> : vector<256x128xf32>
    %7 = tpu.matmul %4, %5, %cst_3 {dimension_numbers = #tpu.dot_dimension_numbers<[1], [0], [0], [1], [0, 0, 1, 1], [], []>} : vector<256x128xbf16>, vector<128x128xbf16>, vector<256x128xf32> -> vector<256x128xf32>
    %8 = arith.addf %6, %7 : vector<256x128xf32>
    %c0_4 = arith.constant 0 : index
    %c0_5 = arith.constant 0 : index
    %9 = vector.load %arg3[%c0_4, %c0_5] : memref<128x128xbf16, #tpu.memory_space<vmem>>, vector<128x128xbf16>
    %cst_6 = arith.constant dense<0.000000e+00> : vector<256x128xf32>
    %10 = tpu.matmul %1, %9, %cst_6 {dimension_numbers = #tpu.dot_dimension_numbers<[1], [0], [0], [1], [0, 0, 1, 1], [], []>} : vector<256x128xbf16>, vector<128x128xbf16>, vector<256x128xf32> -> vector<256x128xf32>
    %11 = arith.addf %8, %10 : vector<256x128xf32>
    %12 = arith.truncf %11 : vector<256x128xf32> to vector<256x128xbf16>
    %c0_7 = arith.constant 0 : index
    %c0_8 = arith.constant 0 : index
    %13 = vector.load %arg4[%c0_7, %c0_8] : memref<256x128xbf16, #tpu.memory_space<vmem>>, vector<256x128xbf16>
    tpu.vector_store %arg4[%c0_7, %c0_8], %12 {strides = array<i32>} : memref<256x128xbf16, #tpu.memory_space<vmem>>, vector<256x128xbf16>,
    %14 = arith.extf %12 : vector<256x128xbf16> to vector<256x128xf32>
    %15 = arith.subf %11, %14 : vector<256x128xf32>
    %16 = arith.truncf %15 : vector<256x128xf32> to vector<256x128xbf16>
    %c0_9 = arith.constant 0 : index
    %c0_10 = arith.constant 0 : index
    %17 = vector.load %arg5[%c0_9, %c0_10] : memref<256x128xbf16, #tpu.memory_space<vmem>>, vector<256x128xbf16>
    tpu.vector_store %arg5[%c0_9, %c0_10], %16 {strides = array<i32>} : memref<256x128xbf16, #tpu.memory_space<vmem>>, vector<256x128xbf16>,
    return
  }
  func.func @transform_0(%arg0: i32) -> (i32, i32) {
    %c0_i32 = arith.constant 0 : i32
    %c0_i32_0 = arith.constant 0 : i32
    return %arg0, %c0_i32 : i32, i32
  }
  func.func @transform_1(%arg0: i32) -> (i32, i32) {
    %c0_i32 = arith.constant 0 : i32
    %c0_i32_0 = arith.constant 0 : i32
    %c0_i32_1 = arith.constant 0 : i32
    return %c0_i32, %c0_i32_0 : i32, i32
  }
  func.func @transform_2(%arg0: i32) -> (i32, i32) {
    %c0_i32 = arith.constant 0 : i32
    %c0_i32_0 = arith.constant 0 : i32
    %c0_i32_1 = arith.constant 0 : i32
    return %c0_i32, %c0_i32_0 : i32, i32
  }
  func.func @transform_3(%arg0: i32) -> (i32, i32) {
    %c0_i32 = arith.constant 0 : i32
    %c0_i32_0 = arith.constant 0 : i32
    return %arg0, %c0_i32 : i32, i32
  }
  func.func @transform_4(%arg0: i32) -> (i32, i32) {
    %c0_i32 = arith.constant 0 : i32
    %c0_i32_0 = arith.constant 0 : i32
    return %arg0, %c0_i32 : i32, i32
  }
}

</mosaic_0001>

<llo_original>
// kernel: tpu_custom_call.1
$region0: #{tpu_custom_call.1}
  #allocation0 [shape = 'u32[]', space=smem, size = 0x4, offset = 0x4, fixed_abs, tag = 'smem constant byte address 0x4 - core index']
  #allocation1 [shape = 'u32[144,128]{1,0:T(1,128)}', space=vmem, size = 0x12000, scoped, tag = 'internal scratch']
  %s0 = inlined_call_operand.hbm [shape: f32[256,128], index: 0, kind: input, shape index: {}]
  %s1 = inlined_call_operand.hbm [shape: bf16[128,128], index: 1, kind: input, shape index: {}]
  %s2 = inlined_call_operand.hbm [shape: bf16[128,128], index: 2, kind: input, shape index: {}]
  %s3 = inlined_call_operand.hbm [shape: bf16[256,128], index: 3, kind: output, shape index: {0}]
  %s4 = inlined_call_operand.hbm [shape: bf16[256,128], index: 4, kind: output, shape index: {1}]
  %5 = xla_tuple %s3, %s4
  %s6 = sld [smem:[#allocation0]]
  $region42: #{tpu_custom_call.1} parent=0
    _
  %s8 = ssub.s32 1, %s6
  %s9 = scalar_select 0, %s8, %s6
  $region1: #{tpu_custom_call.1} parent=0
    #allocation2 [shape = 'u8[131072]{0}', space=vmem, size = 0x20000, scoped, tag = 'input window, operand 0, single buffered']
    #allocation3 [shape = 's32[1]{0}', space=sflag, size = 0x4, scoped, tag = 'scoped memory for tpu_custom_call.1']
    #allocation4 [shape = 's32[1]{0}', space=sflag, size = 0x4, scoped, tag = 'scoped memory for tpu_custom_call.1']
    #allocation5 [shape = 'u8[32768]{0}', space=vmem, size = 0x8000, scoped, tag = 'input window, operand 1, single buffered']
    #allocation6 [shape = 's32[1]{0}', space=sflag, size = 0x4, scoped, tag = 'scoped memory for tpu_custom_call.1']
    #allocation7 [shape = 'u8[32768]{0}', space=vmem, size = 0x8000, scoped, tag = 'input window, operand 2, single buffered']
    #allocation8 [shape = 'u8[65536]{0}', space=vmem, size = 0x10000, scoped, tag = 'output window, operand 0, single buffered']
    #allocation9 [shape = 'u8[65536]{0}', space=vmem, size = 0x10000, scoped, tag = 'output window, operand 1, single buffered']
    #allocation10 [shape = 's32[1]{0}', space=sflag, size = 0x4, scoped, tag = 'scoped memory for tpu_custom_call.1']
    %10 = vsyncpa [#allocation3], 0
    %11 = vsyncpa [#allocation6], 0
    %12 = vsyncpa [#allocation4], 0
    %13 = vsyncpa [#allocation10], 0
    // Predicated region
    $region2: #{tpu_custom_call.1} parent=1 // pred_check
      _
    $region3: #{tpu_custom_call.1} parent=1 // pred_check_branch
      %15 = sbr.rel (0) target = $region5
    $region4: #{tpu_custom_call.1} parent=1 // pred_region
      %s17 = ssub.s32 4096, 4096
      %18 = vsyncadd [#allocation3], %s17
      %s19 = sshll.u32 [#allocation2], 4
      %s20 = int_to_ptr.vmem [resolvable:$true] %s19
      %25 = dma.hbm_to_vmem [thread:$0]  %s0, 4096, %s20, [#allocation3], 128, 128, 8
    $region5: #{tpu_custom_call.1} parent=1 // pred_fallthru
      _
    // Predicated region
    $region6: #{tpu_custom_call.1} parent=1 // pred_check
      _
    $region7: #{tpu_custom_call.1} parent=1 // pred_check_branch
      %27 = sbr.rel (0) target = $region9
    $region8: #{tpu_custom_call.1} parent=1 // pred_region
      %s29 = ssub.s32 1024, 1024
      %30 = vsyncadd [#allocation6], %s29
      %s31 = sshll.u32 [#allocation5], 4
      %s32 = int_to_ptr.vmem [resolvable:$true] %s31
      %37 = dma.hbm_to_vmem [thread:$0]  %s1, 1024, %s32, [#allocation6], 64, 64, 4
    $region9: #{tpu_custom_call.1} parent=1 // pred_fallthru
      _
    // Predicated region
    $region10: #{tpu_custom_call.1} parent=1 // pred_check
      _
    $region11: #{tpu_custom_call.1} parent=1 // pred_check_branch
      %39 = sbr.rel (0) target = $region13
    $region12: #{tpu_custom_call.1} parent=1 // pred_region
      %s41 = ssub.s32 1024, 1024
      %42 = vsyncadd [#allocation6], %s41
      %s43 = sshll.u32 [#allocation7], 4
      %s44 = int_to_ptr.vmem [resolvable:$true] %s43
      %49 = dma.hbm_to_vmem [thread:$0]  %s2, 1024, %s44, [#allocation6], 64, 64, 4
    $region13: #{tpu_custom_call.1} parent=1 // pred_fallthru
      _
    // Predicated region
    $region14: #{tpu_custom_call.1} parent=1 // pred_check
      _
    $region15: #{tpu_custom_call.1} parent=1 // pred_check_branch
      %51 = sbr.rel (0) target = $region17
    $region16: #{tpu_custom_call.1} parent=1 // pred_region
      %52 = dma.done [#allocation3], 4096
    $region17: #{tpu_custom_call.1} parent=1 // pred_fallthru
      _
    // Predicated region
    $region18: #{tpu_custom_call.1} parent=1 // pred_check
      _
    $region19: #{tpu_custom_call.1} parent=1 // pred_check_branch
      %54 = sbr.rel (0) target = $region21
    $region20: #{tpu_custom_call.1} parent=1 // pred_region
      %55 = dma.done [#allocation6], 1024
    $region21: #{tpu_custom_call.1} parent=1 // pred_fallthru
      _
    // Predicated region
    $region22: #{tpu_custom_call.1} parent=1 // pred_check
      _
    $region23: #{tpu_custom_call.1} parent=1 // pred_check_branch
      %57 = sbr.rel (0) target = $region25
    $region24: #{tpu_custom_call.1} parent=1 // pred_region
      %58 = dma.done [#allocation6], 1024
    $region25: #{tpu_custom_call.1} parent=1 // pred_fallthru
      _
    %v60 = vld [vmem:[#allocation2] sm:$0xff]
    %v61 = vld [vmem:[#allocation2 + $0x8] sm:$0xff]
    %v62 = vld [vmem:[#allocation2 + $0x10] sm:$0xff]
    %v63 = vld [vmem:[#allocation2 + $0x18] sm:$0xff]
    %v64 = vld [vmem:[#allocation2 + $0x20] sm:$0xff]
    %v65 = vld [vmem:[#allocation2 + $0x28] sm:$0xff]
    %v66 = vld [vmem:[#allocation2 + $0x30] sm:$0xff]
    %v67 = vld [vmem:[#allocation2 + $0x38] sm:$0xff]
    %v68 = vld [vmem:[#allocation2 + $0x40] sm:$0xff]
    %v69 = vld [vmem:[#allocation2 + $0x48] sm:$0xff]
    %v70 = vld [vmem:[#allocation2 + $0x50] sm:$0xff]
    %v71 = vld [vmem:[#allocation2 + $0x58] sm:$0xff]
    %v72 = vld [vmem:[#allocation2 + $0x60] sm:$0xff]
    %v73 = vld [vmem:[#allocation2 + $0x68] sm:$0xff]
    %v74 = vld [vmem:[#allocation2 + $0x70] sm:$0xff]
    %v75 = vld [vmem:[#allocation2 + $0x78] sm:$0xff]
    %v76 = vld [vmem:[#allocation2 + $0x80] sm:$0xff]
    %v77 = vld [vmem:[#allocation2 + $0x88] sm:$0xff]
    %v78 = vld [vmem:[#allocation2 + $0x90] sm:$0xff]
    %v79 = vld [vmem:[#allocation2 + $0x98] sm:$0xff]
    %v80 = vld [vmem:[#allocation2 + $0xa0] sm:$0xff]
    %v81 = vld [vmem:[#allocation2 + $0xa8] sm:$0xff]
    %v82 = vld [vmem:[#allocation2 + $0xb0] sm:$0xff]
    %v83 = vld [vmem:[#allocation2 + $0xb8] sm:$0xff]
    %v84 = vld [vmem:[#allocation2 + $0xc0] sm:$0xff]
    %v85 = vld [vmem:[#allocation2 + $0xc8] sm:$0xff]
    %v86 = vld [vmem:[#allocation2 + $0xd0] sm:$0xff]
    %v87 = vld [vmem:[#allocation2 + $0xd8] sm:$0xff]
    %v88 = vld [vmem:[#allocation2 + $0xe0] sm:$0xff]
    %v89 = vld [vmem:[#allocation2 + $0xe8] sm:$0xff]
    %v90 = vld [vmem:[#allocation2 + $0xf0] sm:$0xff]
    %v91 = vld [vmem:[#allocation2 + $0xf8] sm:$0xff]
    %v92 = vpack.c.bf16 %v61, %v60
    %v93 = vpack.c.bf16 %v63, %v62
    %v94 = vpack.c.bf16 %v65, %v64
    %v95 = vpack.c.bf16 %v67, %v66
    %v96 = vpack.c.bf16 %v69, %v68
    %v97 = vpack.c.bf16 %v71, %v70
    %v98 = vpack.c.bf16 %v73, %v72
    %v99 = vpack.c.bf16 %v75, %v74
    %v100 = vpack.c.bf16 %v77, %v76
    %v101 = vpack.c.bf16 %v79, %v78
    %v102 = vpack.c.bf16 %v81, %v80
    %v103 = vpack.c.bf16 %v83, %v82
    %v104 = vpack.c.bf16 %v85, %v84
    %v105 = vpack.c.bf16 %v87, %v86
    %v106 = vpack.c.bf16 %v89, %v88
    %v107 = vpack.c.bf16 %v91, %v90
    %v108 = vunpack.c.l.bf16 %v92
    %v109 = vunpack.c.h.bf16 %v92
    %v110 = vunpack.c.l.bf16 %v93
    %v111 = vunpack.c.h.bf16 %v93
    %v112 = vunpack.c.l.bf16 %v94
    %v113 = vunpack.c.h.bf16 %v94
    %v114 = vunpack.c.l.bf16 %v95
    %v115 = vunpack.c.h.bf16 %v95
    %v116 = vunpack.c.l.bf16 %v96
    %v117 = vunpack.c.h.bf16 %v96
    %v118 = vunpack.c.l.bf16 %v97
    %v119 = vunpack.c.h.bf16 %v97
    %v120 = vunpack.c.l.bf16 %v98
    %v121 = vunpack.c.h.bf16 %v98
    %v122 = vunpack.c.l.bf16 %v99
    %v123 = vunpack.c.h.bf16 %v99
    %v124 = vunpack.c.l.bf16 %v100
    %v125 = vunpack.c.h.bf16 %v100
    %v126 = vunpack.c.l.bf16 %v101
    %v127 = vunpack.c.h.bf16 %v101
    %v128 = vunpack.c.l.bf16 %v102
    %v129 = vunpack.c.h.bf16 %v102
    %v130 = vunpack.c.l.bf16 %v103
    %v131 = vunpack.c.h.bf16 %v103
    %v132 = vunpack.c.l.bf16 %v104
    %v133 = vunpack.c.h.bf16 %v104
    %v134 = vunpack.c.l.bf16 %v105
    %v135 = vunpack.c.h.bf16 %v105
    %v136 = vunpack.c.l.bf16 %v106
    %v137 = vunpack.c.h.bf16 %v106
    %v138 = vunpack.c.l.bf16 %v107
    %v139 = vunpack.c.h.bf16 %v107
    %v140 = vsub.f32 %v60, %v108
    %v141 = vsub.f32 %v61, %v109
    %v142 = vsub.f32 %v62, %v110
    %v143 = vsub.f32 %v63, %v111
    %v144 = vsub.f32 %v64, %v112
    %v145 = vsub.f32 %v65, %v113
    %v146 = vsub.f32 %v66, %v114
    %v147 = vsub.f32 %v67, %v115
    %v148 = vsub.f32 %v68, %v116
    %v149 = vsub.f32 %v69, %v117
    %v150 = vsub.f32 %v70, %v118
    %v151 = vsub.f32 %v71, %v119
    %v152 = vsub.f32 %v72, %v120
    %v153 = vsub.f32 %v73, %v121
    %v154 = vsub.f32 %v74, %v122
    %v155 = vsub.f32 %v75, %v123
    %v156 = vsub.f32 %v76, %v124
    %v157 = vsub.f32 %v77, %v125
    %v158 = vsub.f32 %v78, %v126
    %v159 = vsub.f32 %v79, %v127
    %v160 = vsub.f32 %v80, %v128
    %v161 = vsub.f32 %v81, %v129
    %v162 = vsub.f32 %v82, %v130
    %v163 = vsub.f32 %v83, %v131
    %v164 = vsub.f32 %v84, %v132
    %v165 = vsub.f32 %v85, %v133
    %v166 = vsub.f32 %v86, %v134
    %v167 = vsub.f32 %v87, %v135
    %v168 = vsub.f32 %v88, %v136
    %v169 = vsub.f32 %v89, %v137
    %v170 = vsub.f32 %v90, %v138
    %v171 = vsub.f32 %v91, %v139
    %v172 = vpack.c.bf16 %v141, %v140
    %v173 = vpack.c.bf16 %v143, %v142
    %v174 = vpack.c.bf16 %v145, %v144
    %v175 = vpack.c.bf16 %v147, %v146
    %v176 = vpack.c.bf16 %v149, %v148
    %v177 = vpack.c.bf16 %v151, %v150
    %v178 = vpack.c.bf16 %v153, %v152
    %v179 = vpack.c.bf16 %v155, %v154
    %v180 = vpack.c.bf16 %v157, %v156
    %v181 = vpack.c.bf16 %v159, %v158
    %v182 = vpack.c.bf16 %v161, %v160
    %v183 = vpack.c.bf16 %v163, %v162
    %v184 = vpack.c.bf16 %v165, %v164
    %v185 = vpack.c.bf16 %v167, %v166
    %v186 = vpack.c.bf16 %v169, %v168
    %v187 = vpack.c.bf16 %v171, %v170
    %v188 = vld [vmem:[#allocation5] sm:$0xf]
    %v189 = vld [vmem:[#allocation5 + $0x4] sm:$0xf]
    %v190 = vld [vmem:[#allocation5 + $0x8] sm:$0xf]
    %v191 = vld [vmem:[#allocation5 + $0xc] sm:$0xf]
    %v192 = vld [vmem:[#allocation5 + $0x10] sm:$0xf]
    %v193 = vld [vmem:[#allocation5 + $0x14] sm:$0xf]
    %v194 = vld [vmem:[#allocation5 + $0x18] sm:$0xf]
    %v195 = vld [vmem:[#allocation5 + $0x1c] sm:$0xf]
    %v196 = vld [vmem:[#allocation5 + $0x20] sm:$0xf]
    %v197 = vld [vmem:[#allocation5 + $0x24] sm:$0xf]
    %v198 = vld [vmem:[#allocation5 + $0x28] sm:$0xf]
    %v199 = vld [vmem:[#allocation5 + $0x2c] sm:$0xf]
    %v200 = vld [vmem:[#allocation5 + $0x30] sm:$0xf]
    %v201 = vld [vmem:[#allocation5 + $0x34] sm:$0xf]
    %v202 = vld [vmem:[#allocation5 + $0x38] sm:$0xf]
    %v203 = vld [vmem:[#allocation5 + $0x3c] sm:$0xf]
    %v220 = vunpack.c.l.b16 %v188
    %v221 = vunpack.c.l.b16 %v189
    %v222 = vunpack.c.l.b16 %v190
    %v223 = vunpack.c.l.b16 %v191
    %v224 = vunpack.c.l.b16 %v192
    %v225 = vunpack.c.l.b16 %v193
    %v226 = vunpack.c.l.b16 %v194
    %v227 = vunpack.c.l.b16 %v195
    %v228 = vunpack.c.l.b16 %v196
    %v229 = vunpack.c.l.b16 %v197
    %v230 = vunpack.c.l.b16 %v198
    %v231 = vunpack.c.l.b16 %v199
    %v232 = vunpack.c.l.b16 %v200
    %v233 = vunpack.c.l.b16 %v201
    %v234 = vunpack.c.l.b16 %v202
    %v235 = vunpack.c.l.b16 %v203
    %v236 = vpack.c.b16 %v221, %v220
    %v237 = vpack.c.b16 %v223, %v222
    %v238 = vpack.c.b16 %v225, %v224
    %v239 = vpack.c.b16 %v227, %v226
    %v240 = vpack.c.b16 %v229, %v228
    %v241 = vpack.c.b16 %v231, %v230
    %v242 = vpack.c.b16 %v233, %v232
    %v243 = vpack.c.b16 %v235, %v234
    %252 = vmatprep.subr.bf16.mxu0 0
    %253 = vmatpush1.bf16.msra.mxu0 %v236
    %254 = vmatprep.subr.bf16.mxu0 0
    %255 = vmatpush1.bf16.msra.mxu0 %v237
    %256 = vmatprep.subr.bf16.mxu0 0
    %257 = vmatpush1.bf16.msra.mxu0 %v238
    %258 = vmatprep.subr.bf16.mxu0 0
    %259 = vmatpush1.bf16.msra.mxu0 %v239
    %260 = vmatprep.subr.bf16.mxu0 0
    %261 = vmatpush1.bf16.msra.mxu0 %v240
    %262 = vmatprep.subr.bf16.mxu0 0
    %263 = vmatpush1.bf16.msra.mxu0 %v241
    %264 = vmatprep.subr.bf16.mxu0 0
    %265 = vmatpush1.bf16.msra.mxu0 %v242
    %266 = vmatprep.subr.bf16.mxu0 0
    %267 = vmatpush1.bf16.msra.mxu0 %v243
    %268 = vmatprep.subr.bf16.mxu0 0
    %269 = vmatpush1.bf16.msra.mxu0 0
    %270 = vmatprep.subr.bf16.mxu0 0
    %271 = vmatpush1.bf16.msra.mxu0 0
    %272 = vmatprep.subr.bf16.mxu0 0
    %273 = vmatpush1.bf16.msra.mxu0 0
    %274 = vmatprep.subr.bf16.mxu0 0
    %275 = vmatpush1.bf16.msra.mxu0 0
    %276 = vmatprep.subr.bf16.mxu0 0
    %277 = vmatpush1.bf16.msra.mxu0 0
    %278 = vmatprep.subr.bf16.mxu0 0
    %279 = vmatpush1.bf16.msra.mxu0 0
    %280 = vmatprep.subr.bf16.mxu0 0
    %281 = vmatpush1.bf16.msra.mxu0 0
    %282 = vmatprep.subr.bf16.mxu0 0
    %283 = vmatpush1.bf16.msra.mxu0 0
    %284 = vmatprep.mubr.bf16.mxu0 0
    %285 = vmatmul.mubr.bf16.gmra.mrb[0].mxu0 %v172
    %v286 = vpop.f32.mrb[0].mxu0
    %v287 = vadd.f32 0.0, %v286
    %v288 = vpop.f32.mrb[0].mxu0
    %v289 = vpop.f32.mrb[0].mxu0
    %v290 = vadd.f32 0.0, %v289
    %v291 = vpop.f32.mrb[0].mxu0
    %292 = vmatprep.mubr.bf16.mxu0 0
    %293 = vmatmul.mubr.bf16.gmra.mrb[0].mxu0 %v173
    %v294 = vpop.f32.mrb[0].mxu0
    %v295 = vadd.f32 0.0, %v294
    %v296 = vpop.f32.mrb[0].mxu0
    %v297 = vpop.f32.mrb[0].mxu0
    %v298 = vadd.f32 0.0, %v297
    %v299 = vpop.f32.mrb[0].mxu0
    %300 = vmatprep.mubr.bf16.mxu0 0
    %301 = vmatmul.mubr.bf16.gmra.mrb[0].mxu0 %v174
    %v302 = vpop.f32.mrb[0].mxu0
    %v303 = vadd.f32 0.0, %v302
    %v304 = vpop.f32.mrb[0].mxu0
    %v305 = vpop.f32.mrb[0].mxu0
    %v306 = vadd.f32 0.0, %v305
    %v307 = vpop.f32.mrb[0].mxu0
    %308 = vmatprep.mubr.bf16.mxu0 0
    %309 = vmatmul.mubr.bf16.gmra.mrb[0].mxu0 %v175
    %v310 = vpop.f32.mrb[0].mxu0
    %v311 = vadd.f32 0.0, %v310
    %v312 = vpop.f32.mrb[0].mxu0
    %v313 = vpop.f32.mrb[0].mxu0
    %v314 = vadd.f32 0.0, %v313
    %v315 = vpop.f32.mrb[0].mxu0
    %316 = vmatprep.mubr.bf16.mxu0 0
    %317 = vmatmul.mubr.bf16.gmra.mrb[0].mxu0 %v176
    %v318 = vpop.f32.mrb[0].mxu0
    %v319 = vadd.f32 0.0, %v318
    %v320 = vpop.f32.mrb[0].mxu0
    %v321 = vpop.f32.mrb[0].mxu0
    %v322 = vadd.f32 0.0, %v321
    %v323 = vpop.f32.mrb[0].mxu0
    %324 = vmatprep.mubr.bf16.mxu0 0
    %325 = vmatmul.mubr.bf16.gmra.mrb[0].mxu0 %v177
    %v326 = vpop.f32.mrb[0].mxu0
    %v327 = vadd.f32 0.0, %v326
    %v328 = vpop.f32.mrb[0].mxu0
    %v329 = vpop.f32.mrb[0].mxu0
    %v330 = vadd.f32 0.0, %v329
    %v331 = vpop.f32.mrb[0].mxu0
    %332 = vmatprep.mubr.bf16.mxu0 0
    %333 = vmatmul.mubr.bf16.gmra.mrb[0].mxu0 %v178
    %v334 = vpop.f32.mrb[0].mxu0
    %v335 = vadd.f32 0.0, %v334
    %v336 = vpop.f32.mrb[0].mxu0
    %v337 = vpop.f32.mrb[0].mxu0
    %v338 = vadd.f32 0.0, %v337
    %v339 = vpop.f32.mrb[0].mxu0
    %340 = vmatprep.mubr.bf16.mxu0 0
    %341 = vmatmul.mubr.bf16.gmra.mrb[0].mxu0 %v179
    %v342 = vpop.f32.mrb[0].mxu0
    %v343 = vadd.f32 0.0, %v342
    %v344 = vpop.f32.mrb[0].mxu0
    %v345 = vpop.f32.mrb[0].mxu0
    %v346 = vadd.f32 0.0, %v345
    %v347 = vpop.f32.mrb[0].mxu0
    %348 = vmatprep.mubr.bf16.mxu0 0
    %349 = vmatmul.mubr.bf16.gmra.mrb[0].mxu0 %v180
    %v350 = vpop.f32.mrb[0].mxu0
    %v351 = vadd.f32 0.0, %v350
    %v352 = vpop.f32.mrb[0].mxu0
    %v353 = vpop.f32.mrb[0].mxu0
    %v354 = vadd.f32 0.0, %v353
    %v355 = vpop.f32.mrb[0].mxu0
    %356 = vmatprep.mubr.bf16.mxu0 0
    %357 = vmatmul.mubr.bf16.gmra.mrb[0].mxu0 %v181
    %v358 = vpop.f32.mrb[0].mxu0
    %v359 = vadd.f32 0.0, %v358
    %v360 = vpop.f32.mrb[0].mxu0
    %v361 = vpop.f32.mrb[0].mxu0
    %v362 = vadd.f32 0.0, %v361
    %v363 = vpop.f32.mrb[0].mxu0
    %364 = vmatprep.mubr.bf16.mxu0 0
    %365 = vmatmul.mubr.bf16.gmra.mrb[0].mxu0 %v182
    %v366 = vpop.f32.mrb[0].mxu0
    %v367 = vadd.f32 0.0, %v366
    %v368 = vpop.f32.mrb[0].mxu0
    %v369 = vpop.f32.mrb[0].mxu0
    %v370 = vadd.f32 0.0, %v369
    %v371 = vpop.f32.mrb[0].mxu0
    %372 = vmatprep.mubr.bf16.mxu0 0
    %373 = vmatmul.mubr.bf16.gmra.mrb[0].mxu0 %v183
    %v374 = vpop.f32.mrb[0].mxu0
    %v375 = vadd.f32 0.0, %v374
    %v376 = vpop.f32.mrb[0].mxu0
    %v377 = vpop.f32.mrb[0].mxu0
    %v378 = vadd.f32 0.0, %v377
    %v379 = vpop.f32.mrb[0].mxu0
    %380 = vmatprep.mubr.bf16.mxu0 0
    %381 = vmatmul.mubr.bf16.gmra.mrb[0].mxu0 %v184
    %v382 = vpop.f32.mrb[0].mxu0
    %v383 = vadd.f32 0.0, %v382
    %v384 = vpop.f32.mrb[0].mxu0
    %v385 = vpop.f32.mrb[0].mxu0
    %v386 = vadd.f32 0.0, %v385
    %v387 = vpop.f32.mrb[0].mxu0
    %388 = vmatprep.mubr.bf16.mxu0 0
    %389 = vmatmul.mubr.bf16.gmra.mrb[0].mxu0 %v185
    %v390 = vpop.f32.mrb[0].mxu0
    %v391 = vadd.f32 0.0, %v390
    %v392 = vpop.f32.mrb[0].mxu0
    %v393 = vpop.f32.mrb[0].mxu0
    %v394 = vadd.f32 0.0, %v393
    %v395 = vpop.f32.mrb[0].mxu0
    %396 = vmatprep.mubr.bf16.mxu0 0
    %397 = vmatmul.mubr.bf16.gmra.mrb[0].mxu0 %v186
    %v398 = vpop.f32.mrb[0].mxu0
    %v399 = vadd.f32 0.0, %v398
    %v400 = vpop.f32.mrb[0].mxu0
    %v401 = vpop.f32.mrb[0].mxu0
    %v402 = vadd.f32 0.0, %v401
    %v403 = vpop.f32.mrb[0].mxu0
    %404 = vmatprep.mubr.bf16.mxu0 0
    %405 = vmatmul.mubr.bf16.gmra.mrb[0].mxu0 %v187
    %v406 = vpop.f32.mrb[0].mxu0
    %v407 = vadd.f32 0.0, %v406
    %v408 = vpop.f32.mrb[0].mxu0
    %v409 = vpop.f32.mrb[0].mxu0
    %v410 = vadd.f32 0.0, %v409
    %v411 = vpop.f32.mrb[0].mxu0
    %412 = vdwg.mxu0
    %413 = vmatprep.subr.bf16.mxu0 0
    %414 = vmatpush1.bf16.msra.mxu0 %v236
    %415 = vmatprep.subr.bf16.mxu0 0
    %416 = vmatpush1.bf16.msra.mxu0 %v237
    %417 = vmatprep.subr.bf16.mxu0 0
    %418 = vmatpush1.bf16.msra.mxu0 %v238
    %419 = vmatprep.subr.bf16.mxu0 0
    %420 = vmatpush1.bf16.msra.mxu0 %v239
    %421 = vmatprep.subr.bf16.mxu0 0
    %422 = vmatpush1.bf16.msra.mxu0 %v240
    %423 = vmatprep.subr.bf16.mxu0 0
    %424 = vmatpush1.bf16.msra.mxu0 %v241
    %425 = vmatprep.subr.bf16.mxu0 0
    %426 = vmatpush1.bf16.msra.mxu0 %v242
    %427 = vmatprep.subr.bf16.mxu0 0
    %428 = vmatpush1.bf16.msra.mxu0 %v243
    %429 = vmatprep.subr.bf16.mxu0 0
    %430 = vmatpush1.bf16.msra.mxu0 0
    %431 = vmatprep.subr.bf16.mxu0 0
    %432 = vmatpush1.bf16.msra.mxu0 0
    %433 = vmatprep.subr.bf16.mxu0 0
    %434 = vmatpush1.bf16.msra.mxu0 0
    %435 = vmatprep.subr.bf16.mxu0 0
    %436 = vmatpush1.bf16.msra.mxu0 0
    %437 = vmatprep.subr.bf16.mxu0 0
    %438 = vmatpush1.bf16.msra.mxu0 0
    %439 = vmatprep.subr.bf16.mxu0 0
    %440 = vmatpush1.bf16.msra.mxu0 0
    %441 = vmatprep.subr.bf16.mxu0 0
    %442 = vmatpush1.bf16.msra.mxu0 0
    %443 = vmatprep.subr.bf16.mxu0 0
    %444 = vmatpush1.bf16.msra.mxu0 0
    %445 = vmatprep.mubr.bf16.mxu0 0
    %446 = vmatmul.mubr.bf16.gmra.mrb[0].mxu0 %v92
    %v447 = vpop.f32.mrb[0].mxu0
    %v448 = vadd.f32 %v287, %v447
    %v449 = vpop.f32.mrb[0].mxu0
    %v450 = vpop.f32.mrb[0].mxu0
    %v451 = vadd.f32 %v290, %v450
    %v452 = vpop.f32.mrb[0].mxu0
    %453 = vmatprep.mubr.bf16.mxu0 0
    %454 = vmatmul.mubr.bf16.gmra.mrb[0].mxu0 %v93
    %v455 = vpop.f32.mrb[0].mxu0
    %v456 = vadd.f32 %v295, %v455
    %v457 = vpop.f32.mrb[0].mxu0
    %v458 = vpop.f32.mrb[0].mxu0
    %v459 = vadd.f32 %v298, %v458
    %v460 = vpop.f32.mrb[0].mxu0
    %461 = vmatprep.mubr.bf16.mxu0 0
    %462 = vmatmul.mubr.bf16.gmra.mrb[0].mxu0 %v94
    %v463 = vpop.f32.mrb[0].mxu0
    %v464 = vadd.f32 %v303, %v463
    %v465 = vpop.f32.mrb[0].mxu0
    %v466 = vpop.f32.mrb[0].mxu0
    %v467 = vadd.f32 %v306, %v466
    %v468 = vpop.f32.mrb[0].mxu0
    %469 = vmatprep.mubr.bf16.mxu0 0
    %470 = vmatmul.mubr.bf16.gmra.mrb[0].mxu0 %v95
    %v471 = vpop.f32.mrb[0].mxu0
    %v472 = vadd.f32 %v311, %v471
    %v473 = vpop.f32.mrb[0].mxu0
    %v474 = vpop.f32.mrb[0].mxu0
    %v475 = vadd.f32 %v314, %v474
    %v476 = vpop.f32.mrb[0].mxu0
    %477 = vmatprep.mubr.bf16.mxu0 0
    %478 = vmatmul.mubr.bf16.gmra.mrb[0].mxu0 %v96
    %v479 = vpop.f32.mrb[0].mxu0
    %v480 = vadd.f32 %v319, %v479
    %v481 = vpop.f32.mrb[0].mxu0
    %v482 = vpop.f32.mrb[0].mxu0
    %v483 = vadd.f32 %v322, %v482
    %v484 = vpop.f32.mrb[0].mxu0
    %485 = vmatprep.mubr.bf16.mxu0 0
    %486 = vmatmul.mubr.bf16.gmra.mrb[0].mxu0 %v97
    %v487 = vpop.f32.mrb[0].mxu0
    %v488 = vadd.f32 %v327, %v487
    %v489 = vpop.f32.mrb[0].mxu0
    %v490 = vpop.f32.mrb[0].mxu0
    %v491 = vadd.f32 %v330, %v490
    %v492 = vpop.f32.mrb[0].mxu0
    %493 = vmatprep.mubr.bf16.mxu0 0
    %494 = vmatmul.mubr.bf16.gmra.mrb[0].mxu0 %v98
    %v495 = vpop.f32.mrb[0].mxu0
    %v496 = vadd.f32 %v335, %v495
    %v497 = vpop.f32.mrb[0].mxu0
    %v498 = vpop.f32.mrb[0].mxu0
    %v499 = vadd.f32 %v338, %v498
    %v500 = vpop.f32.mrb[0].mxu0
    %501 = vmatprep.mubr.bf16.mxu0 0
    %502 = vmatmul.mubr.bf16.gmra.mrb[0].mxu0 %v99
    %v503 = vpop.f32.mrb[0].mxu0
    %v504 = vadd.f32 %v343, %v503
    %v505 = vpop.f32.mrb[0].mxu0
    %v506 = vpop.f32.mrb[0].mxu0
    %v507 = vadd.f32 %v346, %v506
    %v508 = vpop.f32.mrb[0].mxu0
    %509 = vmatprep.mubr.bf16.mxu0 0
    %510 = vmatmul.mubr.bf16.gmra.mrb[0].mxu0 %v100
    %v511 = vpop.f32.mrb[0].mxu0
    %v512 = vadd.f32 %v351, %v511
    %v513 = vpop.f32.mrb[0].mxu0
    %v514 = vpop.f32.mrb[0].mxu0
    %v515 = vadd.f32 %v354, %v514
    %v516 = vpop.f32.mrb[0].mxu0
    %517 = vmatprep.mubr.bf16.mxu0 0
    %518 = vmatmul.mubr.bf16.gmra.mrb[0].mxu0 %v101
    %v519 = vpop.f32.mrb[0].mxu0
    %v520 = vadd.f32 %v359, %v519
    %v521 = vpop.f32.mrb[0].mxu0
    %v522 = vpop.f32.mrb[0].mxu0
    %v523 = vadd.f32 %v362, %v522
    %v524 = vpop.f32.mrb[0].mxu0
    %525 = vmatprep.mubr.bf16.mxu0 0
    %526 = vmatmul.mubr.bf16.gmra.mrb[0].mxu0 %v102
    %v527 = vpop.f32.mrb[0].mxu0
    %v528 = vadd.f32 %v367, %v527
    %v529 = vpop.f32.mrb[0].mxu0
    %v530 = vpop.f32.mrb[0].mxu0
    %v531 = vadd.f32 %v370, %v530
    %v532 = vpop.f32.mrb[0].mxu0
    %533 = vmatprep.mubr.bf16.mxu0 0
    %534 = vmatmul.mubr.bf16.gmra.mrb[0].mxu0 %v103
    %v535 = vpop.f32.mrb[0].mxu0
    %v536 = vadd.f32 %v375, %v535
    %v537 = vpop.f32.mrb[0].mxu0
    %v538 = vpop.f32.mrb[0].mxu0
    %v539 = vadd.f32 %v378, %v538
    %v540 = vpop.f32.mrb[0].mxu0
    %541 = vmatprep.mubr.bf16.mxu0 0
    %542 = vmatmul.mubr.bf16.gmra.mrb[0].mxu0 %v104
    %v543 = vpop.f32.mrb[0].mxu0
    %v544 = vadd.f32 %v383, %v543
    %v545 = vpop.f32.mrb[0].mxu0
    %v546 = vpop.f32.mrb[0].mxu0
    %v547 = vadd.f32 %v386, %v546
    %v548 = vpop.f32.mrb[0].mxu0
    %549 = vmatprep.mubr.bf16.mxu0 0
    %550 = vmatmul.mubr.bf16.gmra.mrb[0].mxu0 %v105
    %v551 = vpop.f32.mrb[0].mxu0
    %v552 = vadd.f32 %v391, %v551
    %v553 = vpop.f32.mrb[0].mxu0
    %v554 = vpop.f32.mrb[0].mxu0
    %v555 = vadd.f32 %v394, %v554
    %v556 = vpop.f32.mrb[0].mxu0
    %557 = vmatprep.mubr.bf16.mxu0 0
    %558 = vmatmul.mubr.bf16.gmra.mrb[0].mxu0 %v106
    %v559 = vpop.f32.mrb[0].mxu0
    %v560 = vadd.f32 %v399, %v559
    %v561 = vpop.f32.mrb[0].mxu0
    %v562 = vpop.f32.mrb[0].mxu0
    %v563 = vadd.f32 %v402, %v562
    %v564 = vpop.f32.mrb[0].mxu0
    %565 = vmatprep.mubr.bf16.mxu0 0
    %566 = vmatmul.mubr.bf16.gmra.mrb[0].mxu0 %v107
    %v567 = vpop.f32.mrb[0].mxu0
    %v568 = vadd.f32 %v407, %v567
    %v569 = vpop.f32.mrb[0].mxu0
    %v570 = vpop.f32.mrb[0].mxu0
    %v571 = vadd.f32 %v410, %v570
    %v572 = vpop.f32.mrb[0].mxu0
    %573 = vdwg.mxu0
    %v574 = vld [vmem:[#allocation7] sm:$0xf]
    %v575 = vld [vmem:[#allocation7 + $0x4] sm:$0xf]
    %v576 = vld [vmem:[#allocation7 + $0x8] sm:$0xf]
    %v577 = vld [vmem:[#allocation7 + $0xc] sm:$0xf]
    %v578 = vld [vmem:[#allocation7 + $0x10] sm:$0xf]
    %v579 = vld [vmem:[#allocation7 + $0x14] sm:$0xf]
    %v580 = vld [vmem:[#allocation7 + $0x18] sm:$0xf]
    %v581 = vld [vmem:[#allocation7 + $0x1c] sm:$0xf]
    %v582 = vld [vmem:[#allocation7 + $0x20] sm:$0xf]
    %v583 = vld [vmem:[#allocation7 + $0x24] sm:$0xf]
    %v584 = vld [vmem:[#allocation7 + $0x28] sm:$0xf]
    %v585 = vld [vmem:[#allocation7 + $0x2c] sm:$0xf]
    %v586 = vld [vmem:[#allocation7 + $0x30] sm:$0xf]
    %v587 = vld [vmem:[#allocation7 + $0x34] sm:$0xf]
    %v588 = vld [vmem:[#allocation7 + $0x38] sm:$0xf]
    %v589 = vld [vmem:[#allocation7 + $0x3c] sm:$0xf]
    %v606 = vunpack.c.l.b16 %v574
    %v607 = vunpack.c.l.b16 %v575
    %v608 = vunpack.c.l.b16 %v576
    %v609 = vunpack.c.l.b16 %v577
    %v610 = vunpack.c.l.b16 %v578
    %v611 = vunpack.c.l.b16 %v579
    %v612 = vunpack.c.l.b16 %v580
    %v613 = vunpack.c.l.b16 %v581
    %v614 = vunpack.c.l.b16 %v582
    %v615 = vunpack.c.l.b16 %v583
    %v616 = vunpack.c.l.b16 %v584
    %v617 = vunpack.c.l.b16 %v585
    %v618 = vunpack.c.l.b16 %v586
    %v619 = vunpack.c.l.b16 %v587
    %v620 = vunpack.c.l.b16 %v588
    %v621 = vunpack.c.l.b16 %v589
    %v622 = vpack.c.b16 %v607, %v606
    %v623 = vpack.c.b16 %v609, %v608
    %v624 = vpack.c.b16 %v611, %v610
    %v625 = vpack.c.b16 %v613, %v612
    %v626 = vpack.c.b16 %v615, %v614
    %v627 = vpack.c.b16 %v617, %v616
    %v628 = vpack.c.b16 %v619, %v618
    %v629 = vpack.c.b16 %v621, %v620
    %638 = vmatprep.subr.bf16.mxu0 0
    %639 = vmatpush1.bf16.msra.mxu0 %v622
    %640 = vmatprep.subr.bf16.mxu0 0
    %641 = vmatpush1.bf16.msra.mxu0 %v623
    %642 = vmatprep.subr.bf16.mxu0 0
    %643 = vmatpush1.bf16.msra.mxu0 %v624
    %644 = vmatprep.subr.bf16.mxu0 0
    %645 = vmatpush1.bf16.msra.mxu0 %v625
    %646 = vmatprep.subr.bf16.mxu0 0
    %647 = vmatpush1.bf16.msra.mxu0 %v626
    %648 = vmatprep.subr.bf16.mxu0 0
    %649 = vmatpush1.bf16.msra.mxu0 %v627
    %650 = vmatprep.subr.bf16.mxu0 0
    %651 = vmatpush1.bf16.msra.mxu0 %v628
    %652 = vmatprep.subr.bf16.mxu0 0
    %653 = vmatpush1.bf16.msra.mxu0 %v629
    %654 = vmatprep.subr.bf16.mxu0 0
    %655 = vmatpush1.bf16.msra.mxu0 0
    %656 = vmatprep.subr.bf16.mxu0 0
    %657 = vmatpush1.bf16.msra.mxu0 0
    %658 = vmatprep.subr.bf16.mxu0 0
    %659 = vmatpush1.bf16.msra.mxu0 0
    %660 = vmatprep.subr.bf16.mxu0 0
    %661 = vmatpush1.bf16.msra.mxu0 0
    %662 = vmatprep.subr.bf16.mxu0 0
    %663 = vmatpush1.bf16.msra.mxu0 0
    %664 = vmatprep.subr.bf16.mxu0 0
    %665 = vmatpush1.bf16.msra.mxu0 0
    %666 = vmatprep.subr.bf16.mxu0 0
    %667 = vmatpush1.bf16.msra.mxu0 0
    %668 = vmatprep.subr.bf16.mxu0 0
    %669 = vmatpush1.bf16.msra.mxu0 0
    %670 = vmatprep.mubr.bf16.mxu0 0
    %671 = vmatmul.mubr.bf16.gmra.mrb[0].mxu0 %v92
    %v672 = vpop.f32.mrb[0].mxu0
    %v673 = vadd.f32 0.0, %v672
    %v674 = vpop.f32.mrb[0].mxu0
    %v675 = vpop.f32.mrb[0].mxu0
    %v676 = vadd.f32 0.0, %v675
    %v677 = vpop.f32.mrb[0].mxu0
    %678 = vmatprep.mubr.bf16.mxu0 0
    %679 = vmatmul.mubr.bf16.gmra.mrb[0].mxu0 %v93
    %v680 = vpop.f32.mrb[0].mxu0
    %v681 = vadd.f32 0.0, %v680
    %v682 = vpop.f32.mrb[0].mxu0
    %v683 = vpop.f32.mrb[0].mxu0
    %v684 = vadd.f32 0.0, %v683
    %v685 = vpop.f32.mrb[0].mxu0
    %686 = vmatprep.mubr.bf16.mxu0 0
    %687 = vmatmul.mubr.bf16.gmra.mrb[0].mxu0 %v94
    %v688 = vpop.f32.mrb[0].mxu0
    %v689 = vadd.f32 0.0, %v688
    %v690 = vpop.f32.mrb[0].mxu0
    %v691 = vpop.f32.mrb[0].mxu0
    %v692 = vadd.f32 0.0, %v691
    %v693 = vpop.f32.mrb[0].mxu0
    %694 = vmatprep.mubr.bf16.mxu0 0
    %695 = vmatmul.mubr.bf16.gmra.mrb[0].mxu0 %v95
    %v696 = vpop.f32.mrb[0].mxu0
    %v697 = vadd.f32 0.0, %v696
    %v698 = vpop.f32.mrb[0].mxu0
    %v699 = vpop.f32.mrb[0].mxu0
    %v700 = vadd.f32 0.0, %v699
    %v701 = vpop.f32.mrb[0].mxu0
    %702 = vmatprep.mubr.bf16.mxu0 0
    %703 = vmatmul.mubr.bf16.gmra.mrb[0].mxu0 %v96
    %v704 = vpop.f32.mrb[0].mxu0
    %v705 = vadd.f32 0.0, %v704
    %v706 = vpop.f32.mrb[0].mxu0
    %v707 = vpop.f32.mrb[0].mxu0
    %v708 = vadd.f32 0.0, %v707
    %v709 = vpop.f32.mrb[0].mxu0
    %710 = vmatprep.mubr.bf16.mxu0 0
    %711 = vmatmul.mubr.bf16.gmra.mrb[0].mxu0 %v97
    %v712 = vpop.f32.mrb[0].mxu0
    %v713 = vadd.f32 0.0, %v712
    %v714 = vpop.f32.mrb[0].mxu0
    %v715 = vpop.f32.mrb[0].mxu0
    %v716 = vadd.f32 0.0, %v715
    %v717 = vpop.f32.mrb[0].mxu0
    %718 = vmatprep.mubr.bf16.mxu0 0
    %719 = vmatmul.mubr.bf16.gmra.mrb[0].mxu0 %v98
    %v720 = vpop.f32.mrb[0].mxu0
    %v721 = vadd.f32 0.0, %v720
    %v722 = vpop.f32.mrb[0].mxu0
    %v723 = vpop.f32.mrb[0].mxu0
    %v724 = vadd.f32 0.0, %v723
    %v725 = vpop.f32.mrb[0].mxu0
    %726 = vmatprep.mubr.bf16.mxu0 0
    %727 = vmatmul.mubr.bf16.gmra.mrb[0].mxu0 %v99
    %v728 = vpop.f32.mrb[0].mxu0
    %v729 = vadd.f32 0.0, %v728
    %v730 = vpop.f32.mrb[0].mxu0
    %v731 = vpop.f32.mrb[0].mxu0
    %v732 = vadd.f32 0.0, %v731
    %v733 = vpop.f32.mrb[0].mxu0
    %734 = vmatprep.mubr.bf16.mxu0 0
    %735 = vmatmul.mubr.bf16.gmra.mrb[0].mxu0 %v100
    %v736 = vpop.f32.mrb[0].mxu0
    %v737 = vadd.f32 0.0, %v736
    %v738 = vpop.f32.mrb[0].mxu0
    %v739 = vpop.f32.mrb[0].mxu0
    %v740 = vadd.f32 0.0, %v739
    %v741 = vpop.f32.mrb[0].mxu0
    %742 = vmatprep.mubr.bf16.mxu0 0
    %743 = vmatmul.mubr.bf16.gmra.mrb[0].mxu0 %v101
    %v744 = vpop.f32.mrb[0].mxu0
    %v745 = vadd.f32 0.0, %v744
    %v746 = vpop.f32.mrb[0].mxu0
    %v747 = vpop.f32.mrb[0].mxu0
    %v748 = vadd.f32 0.0, %v747
    %v749 = vpop.f32.mrb[0].mxu0
    %750 = vmatprep.mubr.bf16.mxu0 0
    %751 = vmatmul.mubr.bf16.gmra.mrb[0].mxu0 %v102
    %v752 = vpop.f32.mrb[0].mxu0
    %v753 = vadd.f32 0.0, %v752
    %v754 = vpop.f32.mrb[0].mxu0
    %v755 = vpop.f32.mrb[0].mxu0
    %v756 = vadd.f32 0.0, %v755
    %v757 = vpop.f32.mrb[0].mxu0
    %758 = vmatprep.mubr.bf16.mxu0 0
    %759 = vmatmul.mubr.bf16.gmra.mrb[0].mxu0 %v103
    %v760 = vpop.f32.mrb[0].mxu0
    %v761 = vadd.f32 0.0, %v760
    %v762 = vpop.f32.mrb[0].mxu0
    %v763 = vpop.f32.mrb[0].mxu0
    %v764 = vadd.f32 0.0, %v763
    %v765 = vpop.f32.mrb[0].mxu0
    %766 = vmatprep.mubr.bf16.mxu0 0
    %767 = vmatmul.mubr.bf16.gmra.mrb[0].mxu0 %v104
    %v768 = vpop.f32.mrb[0].mxu0
    %v769 = vadd.f32 0.0, %v768
    %v770 = vpop.f32.mrb[0].mxu0
    %v771 = vpop.f32.mrb[0].mxu0
    %v772 = vadd.f32 0.0, %v771
    %v773 = vpop.f32.mrb[0].mxu0
    %774 = vmatprep.mubr.bf16.mxu0 0
    %775 = vmatmul.mubr.bf16.gmra.mrb[0].mxu0 %v105
    %v776 = vpop.f32.mrb[0].mxu0
    %v777 = vadd.f32 0.0, %v776
    %v778 = vpop.f32.mrb[0].mxu0
    %v779 = vpop.f32.mrb[0].mxu0
    %v780 = vadd.f32 0.0, %v779
    %v781 = vpop.f32.mrb[0].mxu0
    %782 = vmatprep.mubr.bf16.mxu0 0
    %783 = vmatmul.mubr.bf16.gmra.mrb[0].mxu0 %v106
    %v784 = vpop.f32.mrb[0].mxu0
    %v785 = vadd.f32 0.0, %v784
    %v786 = vpop.f32.mrb[0].mxu0
    %v787 = vpop.f32.mrb[0].mxu0
    %v788 = vadd.f32 0.0, %v787
    %v789 = vpop.f32.mrb[0].mxu0
    %790 = vmatprep.mubr.bf16.mxu0 0
    %791 = vmatmul.mubr.bf16.gmra.mrb[0].mxu0 %v107
    %v792 = vpop.f32.mrb[0].mxu0
    %v793 = vadd.f32 0.0, %v792
    %v794 = vpop.f32.mrb[0].mxu0
    %v795 = vpop.f32.mrb[0].mxu0
    %v796 = vadd.f32 0.0, %v795
    %v797 = vpop.f32.mrb[0].mxu0
    %798 = vdwg.mxu0
    %v799 = vadd.f32 %v448, %v673
    %v800 = vadd.f32 %v451, %v676
    %v801 = vadd.f32 %v456, %v681
    %v802 = vadd.f32 %v459, %v684
    %v803 = vadd.f32 %v464, %v689
    %v804 = vadd.f32 %v467, %v692
    %v805 = vadd.f32 %v472, %v697
    %v806 = vadd.f32 %v475, %v700
    %v807 = vadd.f32 %v480, %v705
    %v808 = vadd.f32 %v483, %v708
    %v809 = vadd.f32 %v488, %v713
    %v810 = vadd.f32 %v491, %v716
    %v811 = vadd.f32 %v496, %v721
    %v812 = vadd.f32 %v499, %v724
    %v813 = vadd.f32 %v504, %v729
    %v814 = vadd.f32 %v507, %v732
    %v815 = vadd.f32 %v512, %v737
    %v816 = vadd.f32 %v515, %v740
    %v817 = vadd.f32 %v520, %v745
    %v818 = vadd.f32 %v523, %v748
    %v819 = vadd.f32 %v528, %v753
    %v820 = vadd.f32 %v531, %v756
    %v821 = vadd.f32 %v536, %v761
    %v822 = vadd.f32 %v539, %v764
    %v823 = vadd.f32 %v544, %v769
    %v824 = vadd.f32 %v547, %v772
    %v825 = vadd.f32 %v552, %v777
    %v826 = vadd.f32 %v555, %v780
    %v827 = vadd.f32 %v560, %v785
    %v828 = vadd.f32 %v563, %v788
    %v829 = vadd.f32 %v568, %v793
    %v830 = vadd.f32 %v571, %v796
    %v831 = vpack.c.bf16 %v800, %v799
    %v832 = vpack.c.bf16 %v802, %v801
    %v833 = vpack.c.bf16 %v804, %v803
    %v834 = vpack.c.bf16 %v806, %v805
    %v835 = vpack.c.bf16 %v808, %v807
    %v836 = vpack.c.bf16 %v810, %v809
    %v837 = vpack.c.bf16 %v812, %v811
    %v838 = vpack.c.bf16 %v814, %v813
    %v839 = vpack.c.bf16 %v816, %v815
    %v840 = vpack.c.bf16 %v818, %v817
    %v841 = vpack.c.bf16 %v820, %v819
    %v842 = vpack.c.bf16 %v822, %v821
    %v843 = vpack.c.bf16 %v824, %v823
    %v844 = vpack.c.bf16 %v826, %v825
    %v845 = vpack.c.bf16 %v828, %v827
    %v846 = vpack.c.bf16 %v830, %v829
    %v863 = vunpack.c.l.b16 %v831
    %v864 = vunpack.c.h.b16 %v831
    %v865 = vunpack.c.l.b16 %v832
    %v866 = vunpack.c.h.b16 %v832
    %v867 = vunpack.c.l.b16 %v833
    %v868 = vunpack.c.h.b16 %v833
    %v869 = vunpack.c.l.b16 %v834
    %v870 = vunpack.c.h.b16 %v834
    %v871 = vunpack.c.l.b16 %v835
    %v872 = vunpack.c.h.b16 %v835
    %v873 = vunpack.c.l.b16 %v836
    %v874 = vunpack.c.h.b16 %v836
    %v875 = vunpack.c.l.b16 %v837
    %v876 = vunpack.c.h.b16 %v837
    %v877 = vunpack.c.l.b16 %v838
    %v878 = vunpack.c.h.b16 %v838
    %v879 = vunpack.c.l.b16 %v839
    %v880 = vunpack.c.h.b16 %v839
    %v881 = vunpack.c.l.b16 %v840
    %v882 = vunpack.c.h.b16 %v840
    %v883 = vunpack.c.l.b16 %v841
    %v884 = vunpack.c.h.b16 %v841
    %v885 = vunpack.c.l.b16 %v842
    %v886 = vunpack.c.h.b16 %v842
    %v887 = vunpack.c.l.b16 %v843
    %v888 = vunpack.c.h.b16 %v843
    %v889 = vunpack.c.l.b16 %v844
    %v890 = vunpack.c.h.b16 %v844
    %v891 = vunpack.c.l.b16 %v845
    %v892 = vunpack.c.h.b16 %v845
    %v893 = vunpack.c.l.b16 %v846
    %v894 = vunpack.c.h.b16 %v846
    %v895 = vpack.c.b16 %v863, %v863
    %v896 = vpack.c.b16 %v864, %v864
    %v897 = vpack.c.b16 %v865, %v865
    %v898 = vpack.c.b16 %v866, %v866
    %v899 = vpack.c.b16 %v867, %v867
    %v900 = vpack.c.b16 %v868, %v868
    %v901 = vpack.c.b16 %v869, %v869
    %v902 = vpack.c.b16 %v870, %v870
    %v903 = vpack.c.b16 %v871, %v871
    %v904 = vpack.c.b16 %v872, %v872
    %v905 = vpack.c.b16 %v873, %v873
    %v906 = vpack.c.b16 %v874, %v874
    %v907 = vpack.c.b16 %v875, %v875
    %v908 = vpack.c.b16 %v876, %v876
    %v909 = vpack.c.b16 %v877, %v877
    %v910 = vpack.c.b16 %v878, %v878
    %v911 = vpack.c.b16 %v879, %v879
    %v912 = vpack.c.b16 %v880, %v880
    %v913 = vpack.c.b16 %v881, %v881
    %v914 = vpack.c.b16 %v882, %v882
    %v915 = vpack.c.b16 %v883, %v883
    %v916 = vpack.c.b16 %v884, %v884
    %v917 = vpack.c.b16 %v885, %v885
    %v918 = vpack.c.b16 %v886, %v886
    %v919 = vpack.c.b16 %v887, %v887
    %v920 = vpack.c.b16 %v888, %v888
    %v921 = vpack.c.b16 %v889, %v889
    %v922 = vpack.c.b16 %v890, %v890
    %v923 = vpack.c.b16 %v891, %v891
    %v924 = vpack.c.b16 %v892, %v892
    %v925 = vpack.c.b16 %v893, %v893
    %v926 = vpack.c.b16 %v894, %v894
    %959 = vst [vmem:[#allocation8] sm:$0xf] %v895
    %960 = vst [vmem:[#allocation8 + $0x4] sm:$0xf] %v896
    %961 = vst [vmem:[#allocation8 + $0x8] sm:$0xf] %v897
    %962 = vst [vmem:[#allocation8 + $0xc] sm:$0xf] %v898
    %963 = vst [vmem:[#allocation8 + $0x10] sm:$0xf] %v899
    %964 = vst [vmem:[#allocation8 + $0x14] sm:$0xf] %v900
    %965 = vst [vmem:[#allocation8 + $0x18] sm:$0xf] %v901
    %966 = vst [vmem:[#allocation8 + $0x1c] sm:$0xf] %v902
    %967 = vst [vmem:[#allocation8 + $0x20] sm:$0xf] %v903
    %968 = vst [vmem:[#allocation8 + $0x24] sm:$0xf] %v904
    %969 = vst [vmem:[#allocation8 + $0x28] sm:$0xf] %v905
    %970 = vst [vmem:[#allocation8 + $0x2c] sm:$0xf] %v906
    %971 = vst [vmem:[#allocation8 + $0x30] sm:$0xf] %v907
    %972 = vst [vmem:[#allocation8 + $0x34] sm:$0xf] %v908
    %973 = vst [vmem:[#allocation8 + $0x38] sm:$0xf] %v909
    %974 = vst [vmem:[#allocation8 + $0x3c] sm:$0xf] %v910
    %975 = vst [vmem:[#allocation8 + $0x40] sm:$0xf] %v911
    %976 = vst [vmem:[#allocation8 + $0x44] sm:$0xf] %v912
    %977 = vst [vmem:[#allocation8 + $0x48] sm:$0xf] %v913
    %978 = vst [vmem:[#allocation8 + $0x4c] sm:$0xf] %v914
    %979 = vst [vmem:[#allocation8 + $0x50] sm:$0xf] %v915
    %980 = vst [vmem:[#allocation8 + $0x54] sm:$0xf] %v916
    %981 = vst [vmem:[#allocation8 + $0x58] sm:$0xf] %v917
    %982 = vst [vmem:[#allocation8 + $0x5c] sm:$0xf] %v918
    %983 = vst [vmem:[#allocation8 + $0x60] sm:$0xf] %v919
    %984 = vst [vmem:[#allocation8 + $0x64] sm:$0xf] %v920
    %985 = vst [vmem:[#allocation8 + $0x68] sm:$0xf] %v921
    %986 = vst [vmem:[#allocation8 + $0x6c] sm:$0xf] %v922
    %987 = vst [vmem:[#allocation8 + $0x70] sm:$0xf] %v923
    %988 = vst [vmem:[#allocation8 + $0x74] sm:$0xf] %v924
    %989 = vst [vmem:[#allocation8 + $0x78] sm:$0xf] %v925
    %990 = vst [vmem:[#allocation8 + $0x7c] sm:$0xf] %v926
    %v991 = vunpack.c.l.bf16 %v831
    %v992 = vunpack.c.h.bf16 %v831
    %v993 = vunpack.c.l.bf16 %v832
    %v994 = vunpack.c.h.bf16 %v832
    %v995 = vunpack.c.l.bf16 %v833
    %v996 = vunpack.c.h.bf16 %v833
    %v997 = vunpack.c.l.bf16 %v834
    %v998 = vunpack.c.h.bf16 %v834
    %v999 = vunpack.c.l.bf16 %v835
    %v1000 = vunpack.c.h.bf16 %v835
    %v1001 = vunpack.c.l.bf16 %v836
    %v1002 = vunpack.c.h.bf16 %v836
    %v1003 = vunpack.c.l.bf16 %v837
    %v1004 = vunpack.c.h.bf16 %v837
    %v1005 = vunpack.c.l.bf16 %v838
    %v1006 = vunpack.c.h.bf16 %v838
    %v1007 = vunpack.c.l.bf16 %v839
    %v1008 = vunpack.c.h.bf16 %v839
    %v1009 = vunpack.c.l.bf16 %v840
    %v1010 = vunpack.c.h.bf16 %v840
    %v1011 = vunpack.c.l.bf16 %v841
    %v1012 = vunpack.c.h.bf16 %v841
    %v1013 = vunpack.c.l.bf16 %v842
    %v1014 = vunpack.c.h.bf16 %v842
    %v1015 = vunpack.c.l.bf16 %v843
    %v1016 = vunpack.c.h.bf16 %v843
    %v1017 = vunpack.c.l.bf16 %v844
    %v1018 = vunpack.c.h.bf16 %v844
    %v1019 = vunpack.c.l.bf16 %v845
    %v1020 = vunpack.c.h.bf16 %v845
    %v1021 = vunpack.c.l.bf16 %v846
    %v1022 = vunpack.c.h.bf16 %v846
    %v1023 = vsub.f32 %v799, %v991
    %v1024 = vsub.f32 %v800, %v992
    %v1025 = vsub.f32 %v801, %v993
    %v1026 = vsub.f32 %v802, %v994
    %v1027 = vsub.f32 %v803, %v995
    %v1028 = vsub.f32 %v804, %v996
    %v1029 = vsub.f32 %v805, %v997
    %v1030 = vsub.f32 %v806, %v998
    %v1031 = vsub.f32 %v807, %v999
    %v1032 = vsub.f32 %v808, %v1000
    %v1033 = vsub.f32 %v809, %v1001
    %v1034 = vsub.f32 %v810, %v1002
    %v1035 = vsub.f32 %v811, %v1003
    %v1036 = vsub.f32 %v812, %v1004
    %v1037 = vsub.f32 %v813, %v1005
    %v1038 = vsub.f32 %v814, %v1006
    %v1039 = vsub.f32 %v815, %v1007
    %v1040 = vsub.f32 %v816, %v1008
    %v1041 = vsub.f32 %v817, %v1009
    %v1042 = vsub.f32 %v818, %v1010
    %v1043 = vsub.f32 %v819, %v1011
    %v1044 = vsub.f32 %v820, %v1012
    %v1045 = vsub.f32 %v821, %v1013
    %v1046 = vsub.f32 %v822, %v1014
    %v1047 = vsub.f32 %v823, %v1015
    %v1048 = vsub.f32 %v824, %v1016
    %v1049 = vsub.f32 %v825, %v1017
    %v1050 = vsub.f32 %v826, %v1018
    %v1051 = vsub.f32 %v827, %v1019
    %v1052 = vsub.f32 %v828, %v1020
    %v1053 = vsub.f32 %v829, %v1021
    %v1054 = vsub.f32 %v830, %v1022
    %v1055 = vpack.c.bf16 %v1024, %v1023
    %v1056 = vpack.c.bf16 %v1026, %v1025
    %v1057 = vpack.c.bf16 %v1028, %v1027
    %v1058 = vpack.c.bf16 %v1030, %v1029
    %v1059 = vpack.c.bf16 %v1032, %v1031
    %v1060 = vpack.c.bf16 %v1034, %v1033
    %v1061 = vpack.c.bf16 %v1036, %v1035
    %v1062 = vpack.c.bf16 %v1038, %v1037
    %v1063 = vpack.c.bf16 %v1040, %v1039
    %v1064 = vpack.c.bf16 %v1042, %v1041
    %v1065 = vpack.c.bf16 %v1044, %v1043
    %v1066 = vpack.c.bf16 %v1046, %v1045
    %v1067 = vpack.c.bf16 %v1048, %v1047
    %v1068 = vpack.c.bf16 %v1050, %v1049
    %v1069 = vpack.c.bf16 %v1052, %v1051
    %v1070 = vpack.c.bf16 %v1054, %v1053
    %v1087 = vunpack.c.l.b16 %v1055
    %v1088 = vunpack.c.h.b16 %v1055
    %v1089 = vunpack.c.l.b16 %v1056
    %v1090 = vunpack.c.h.b16 %v1056
    %v1091 = vunpack.c.l.b16 %v1057
    %v1092 = vunpack.c.h.b16 %v1057
    %v1093 = vunpack.c.l.b16 %v1058
    %v1094 = vunpack.c.h.b16 %v1058
    %v1095 = vunpack.c.l.b16 %v1059
    %v1096 = vunpack.c.h.b16 %v1059
    %v1097 = vunpack.c.l.b16 %v1060
    %v1098 = vunpack.c.h.b16 %v1060
    %v1099 = vunpack.c.l.b16 %v1061
    %v1100 = vunpack.c.h.b16 %v1061
    %v1101 = vunpack.c.l.b16 %v1062
    %v1102 = vunpack.c.h.b16 %v1062
    %v1103 = vunpack.c.l.b16 %v1063
    %v1104 = vunpack.c.h.b16 %v1063
    %v1105 = vunpack.c.l.b16 %v1064
    %v1106 = vunpack.c.h.b16 %v1064
    %v1107 = vunpack.c.l.b16 %v1065
    %v1108 = vunpack.c.h.b16 %v1065
    %v1109 = vunpack.c.l.b16 %v1066
    %v1110 = vunpack.c.h.b16 %v1066
    %v1111 = vunpack.c.l.b16 %v1067
    %v1112 = vunpack.c.h.b16 %v1067
    %v1113 = vunpack.c.l.b16 %v1068
    %v1114 = vunpack.c.h.b16 %v1068
    %v1115 = vunpack.c.l.b16 %v1069
    %v1116 = vunpack.c.h.b16 %v1069
    %v1117 = vunpack.c.l.b16 %v1070
    %v1118 = vunpack.c.h.b16 %v1070
    %v1119 = vpack.c.b16 %v1087, %v1087
    %v1120 = vpack.c.b16 %v1088, %v1088
    %v1121 = vpack.c.b16 %v1089, %v1089
    %v1122 = vpack.c.b16 %v1090, %v1090
    %v1123 = vpack.c.b16 %v1091, %v1091
    %v1124 = vpack.c.b16 %v1092, %v1092
    %v1125 = vpack.c.b16 %v1093, %v1093
    %v1126 = vpack.c.b16 %v1094, %v1094
    %v1127 = vpack.c.b16 %v1095, %v1095
    %v1128 = vpack.c.b16 %v1096, %v1096
    %v1129 = vpack.c.b16 %v1097, %v1097
    %v1130 = vpack.c.b16 %v1098, %v1098
    %v1131 = vpack.c.b16 %v1099, %v1099
    %v1132 = vpack.c.b16 %v1100, %v1100
    %v1133 = vpack.c.b16 %v1101, %v1101
    %v1134 = vpack.c.b16 %v1102, %v1102
    %v1135 = vpack.c.b16 %v1103, %v1103
    %v1136 = vpack.c.b16 %v1104, %v1104
    %v1137 = vpack.c.b16 %v1105, %v1105
    %v1138 = vpack.c.b16 %v1106, %v1106
    %v1139 = vpack.c.b16 %v1107, %v1107
    %v1140 = vpack.c.b16 %v1108, %v1108
    %v1141 = vpack.c.b16 %v1109, %v1109
    %v1142 = vpack.c.b16 %v1110, %v1110
    %v1143 = vpack.c.b16 %v1111, %v1111
    %v1144 = vpack.c.b16 %v1112, %v1112
    %v1145 = vpack.c.b16 %v1113, %v1113
    %v1146 = vpack.c.b16 %v1114, %v1114
    %v1147 = vpack.c.b16 %v1115, %v1115
    %v1148 = vpack.c.b16 %v1116, %v1116
    %v1149 = vpack.c.b16 %v1117, %v1117
    %v1150 = vpack.c.b16 %v1118, %v1118
    %1183 = vst [vmem:[#allocation9] sm:$0xf] %v1119
    %1184 = vst [vmem:[#allocation9 + $0x4] sm:$0xf] %v1120
    %1185 = vst [vmem:[#allocation9 + $0x8] sm:$0xf] %v1121
    %1186 = vst [vmem:[#allocation9 + $0xc] sm:$0xf] %v1122
    %1187 = vst [vmem:[#allocation9 + $0x10] sm:$0xf] %v1123
    %1188 = vst [vmem:[#allocation9 + $0x14] sm:$0xf] %v1124
    %1189 = vst [vmem:[#allocation9 + $0x18] sm:$0xf] %v1125
    %1190 = vst [vmem:[#allocation9 + $0x1c] sm:$0xf] %v1126
    %1191 = vst [vmem:[#allocation9 + $0x20] sm:$0xf] %v1127
    %1192 = vst [vmem:[#allocation9 + $0x24] sm:$0xf] %v1128
    %1193 = vst [vmem:[#allocation9 + $0x28] sm:$0xf] %v1129
    %1194 = vst [vmem:[#allocation9 + $0x2c] sm:$0xf] %v1130
    %1195 = vst [vmem:[#allocation9 + $0x30] sm:$0xf] %v1131
    %1196 = vst [vmem:[#allocation9 + $0x34] sm:$0xf] %v1132
    %1197 = vst [vmem:[#allocation9 + $0x38] sm:$0xf] %v1133
    %1198 = vst [vmem:[#allocation9 + $0x3c] sm:$0xf] %v1134
    %1199 = vst [vmem:[#allocation9 + $0x40] sm:$0xf] %v1135
    %1200 = vst [vmem:[#allocation9 + $0x44] sm:$0xf] %v1136
    %1201 = vst [vmem:[#allocation9 + $0x48] sm:$0xf] %v1137
    %1202 = vst [vmem:[#allocation9 + $0x4c] sm:$0xf] %v1138
    %1203 = vst [vmem:[#allocation9 + $0x50] sm:$0xf] %v1139
    %1204 = vst [vmem:[#allocation9 + $0x54] sm:$0xf] %v1140
    %1205 = vst [vmem:[#allocation9 + $0x58] sm:$0xf] %v1141
    %1206 = vst [vmem:[#allocation9 + $0x5c] sm:$0xf] %v1142
    %1207 = vst [vmem:[#allocation9 + $0x60] sm:$0xf] %v1143
    %1208 = vst [vmem:[#allocation9 + $0x64] sm:$0xf] %v1144
    %1209 = vst [vmem:[#allocation9 + $0x68] sm:$0xf] %v1145
    %1210 = vst [vmem:[#allocation9 + $0x6c] sm:$0xf] %v1146
    %1211 = vst [vmem:[#allocation9 + $0x70] sm:$0xf] %v1147
    %1212 = vst [vmem:[#allocation9 + $0x74] sm:$0xf] %v1148
    %1213 = vst [vmem:[#allocation9 + $0x78] sm:$0xf] %v1149
    %1214 = vst [vmem:[#allocation9 + $0x7c] sm:$0xf] %v1150
    // Predicated region
    $region26: #{tpu_custom_call.1} parent=1 // pred_check
      _
    $region27: #{tpu_custom_call.1} parent=1 // pred_check_branch
      %1216 = sbr.rel (0) target = $region29
    $region28: #{tpu_custom_call.1} parent=1 // pred_region
      %s1218 = ssub.s32 2048, 2048
      %1219 = vsyncadd [#allocation4], %s1218
      %s1220 = sshll.u32 [#allocation8], 4
      %s1221 = int_to_ptr.vmem [resolvable:$true] %s1220
      %1226 = dma.vmem_to_hbm [thread:$0]  %s1221, 2048, %s3, [#allocation4], 64, 64, 4
    $region29: #{tpu_custom_call.1} parent=1 // pred_fallthru
      _
    // Predicated region
    $region30: #{tpu_custom_call.1} parent=1 // pred_check
      _
    $region31: #{tpu_custom_call.1} parent=1 // pred_check_branch
      %1228 = sbr.rel (0) target = $region33
    $region32: #{tpu_custom_call.1} parent=1 // pred_region
      %s1230 = ssub.s32 2048, 2048
      %1231 = vsyncadd [#allocation10], %s1230
      %s1232 = sshll.u32 [#allocation9], 4
      %s1233 = int_to_ptr.vmem [resolvable:$true] %s1232
      %1238 = dma.vmem_to_hbm [thread:$0]  %s1233, 2048, %s4, [#allocation10], 64, 64, 4
    $region33: #{tpu_custom_call.1} parent=1 // pred_fallthru
      _
    // Predicated region
    $region34: #{tpu_custom_call.1} parent=1 // pred_check
      _
    $region35: #{tpu_custom_call.1} parent=1 // pred_check_branch
      %1240 = sbr.rel (0) target = $region37
    $region36: #{tpu_custom_call.1} parent=1 // pred_region
      %1241 = dma.done [#allocation4], 2048
    $region37: #{tpu_custom_call.1} parent=1 // pred_fallthru
      _
    // Predicated region
    $region38: #{tpu_custom_call.1} parent=1 // pred_check
      _
    $region39: #{tpu_custom_call.1} parent=1 // pred_check_branch
      %1243 = sbr.rel (0) target = $region41
    $region40: #{tpu_custom_call.1} parent=1 // pred_region
      %1244 = dma.done [#allocation10], 2048
    $region41: #{tpu_custom_call.1} parent=1 // pred_fallthru
      _
    %1245 = vsyncpa [#allocation3], 1
    %1246 = vsyncpa [#allocation6], 1
    %1247 = vsyncpa [#allocation4], 1
    %1248 = vsyncpa [#allocation10], 1

</llo_original>
